<compile_context>
chip_gen: v5e
topology: v5e:2x2
jax: 0.10.0
libtpu: 0.0.40
codegen_flags: <defaults>
</compile_context>

<pallas_src>
import functools
import math

import jax
import jax.numpy as jnp
from jax.experimental import pallas as pl
from jax.experimental.pallas import tpu as pltpu

_VMEM_LIMIT = 32 * 1024 * 1024  # scoped VMEM: fits v5e/v6e (128 MiB) and v7x (64 MiB)


def _cdiv(a, b):
    return -(-a // b)


def _round_up(a, b):
    return _cdiv(a, b) * b


# ---------------------------------------------------------------------------
# AdaptiveInstanceNorm2d (+ optionally fused LeakyReLU)
# ---------------------------------------------------------------------------

def _adain_kernel(x_ref, w_ref, b_ref, o_ref, *, eps, hw, row_tile, negative_slope):
    # x_ref: (row_tile, HW)  activation rows (one row = one (n, c) instance)
    # w_ref: (rows_pad, 1)   all per-instance scales, VMEM-resident (f32)
    # b_ref: (rows_pad, 1)   all per-instance shifts, VMEM-resident (f32)
    i = pl.program_id(0)
    r0 = pl.multiple_of(i * row_tile, row_tile)

    x = x_ref[...].astype(jnp.float32)
    mean = jnp.mean(x, axis=-1, keepdims=True)
    d = x - mean
    # torch.std default is the unbiased estimator (divide by HW - 1).
    var = jnp.sum(d * d, axis=-1, keepdims=True) * jnp.float32(1.0 / (hw - 1))
    std = jnp.sqrt(var)

    w = w_ref[pl.ds(r0, row_tile), :]
    b = b_ref[pl.ds(r0, row_tile), :]

    # (x - mean) / (std + eps) * w + b  rewritten as one mul + one add per
    # element with per-row coefficients; the reciprocal goes to the EUP.
    inv = pl.reciprocal(std + jnp.float32(eps), approx=False)
    a = w * inv
    c = b - mean * a
    y = x * a + c
    if negative_slope is not None:  # fused LeakyReLU
        y = jnp.where(y >= 0, y, y * jnp.float32(negative_slope))
    o_ref[...] = y.astype(o_ref.dtype)


def adaptive_instance_norm_2d(x, weight, bias, eps=1e-5, *, negative_slope=None,
                              row_tile=None):
    """AdaIN forward. x: (N, C, H, W); weight/bias: (N, C) per-instance affine."""
    N, C, H, W = x.shape
    NC, HW = N * C, H * W

    x2 = x.reshape(NC, HW)
    # Affine params stay in f32 (tiny; no reason to downcast to x.dtype).
    w2 = weight.reshape(NC, 1).astype(jnp.float32)
    b2 = bias.reshape(NC, 1).astype(jnp.float32)

    itemsize = jnp.dtype(x.dtype).itemsize
    sublane = {4: 8, 2: 16, 1: 32}.get(itemsize, 8)

    if row_tile is None:
        # Memory-bound kernel: ~2 MiB input block => ~8-16 MiB per grid step
        # once double buffering + f32 compute copies are counted; well inside
        # the scoped VMEM limit on every generation.
        budget = 2 * 1024 * 1024
        row_tile = max(sublane, budget // max(HW * itemsize, 1))
    row_tile = max(sublane, (row_tile // sublane) * sublane)

    rows_ceil = _round_up(NC, sublane)
    row_tile = min(row_tile, rows_ceil)
    # Keep >= 2 grid steps when possible so the "parallel" axis can shard
    # across v7x's two TensorCores.
    if rows_ceil >= 2 * sublane:
        row_tile = min(row_tile, _round_up(_cdiv(rows_ceil, 2), sublane))

    grid = _cdiv(NC, row_tile)
    rows_pad = grid * row_tile

    # Only the tiny (NC, 1) affine vectors are padded (so the in-kernel slice
    # never runs out of bounds); the (NC, HW) activation is NOT copied/padded.
    if rows_pad != NC:
        w2 = jnp.pad(w2, ((0, rows_pad - NC), (0, 0)), constant_values=1.0)
        b2 = jnp.pad(b2, ((0, rows_pad - NC), (0, 0)))

    kernel = functools.partial(_adain_kernel, eps=eps, hw=HW, row_tile=row_tile,
                               negative_slope=negative_slope)

    # NOTE: HW that is a multiple of 128 (16*16=256 here) keeps output stores
    # lane-dense; other sizes still work but fall back to masked stores.
    out2 = pl.pallas_call(
        kernel,
        out_shape=jax.ShapeDtypeStruct((NC, HW), x.dtype),
        grid=(grid,),
        in_specs=[
            pl.BlockSpec((row_tile, HW), lambda i: (i, 0)),
            pl.BlockSpec((rows_pad, 1), lambda i: (0, 0)),   # whole, resident
            pl.BlockSpec((rows_pad, 1), lambda i: (0, 0)),   # whole, resident
        ],
        out_specs=pl.BlockSpec((row_tile, HW), lambda i: (i, 0)),
        compiler_params=pltpu.CompilerParams(
            dimension_semantics=("parallel",),
            vmem_limit_bytes=_VMEM_LIMIT,
        ),
    )(x2, w2, b2)

    return out2.reshape(N, C, H, W)


# ---------------------------------------------------------------------------
# MXU matmul kernels used for the convolutions (im2col) and the shortcut conv
# ---------------------------------------------------------------------------

def _matmul_bias_kernel(a_ref, b_ref, bias_ref, o_ref, *, scale):
    acc = jnp.dot(a_ref[...].astype(jnp.float32), b_ref[...],
                  preferred_element_type=jnp.float32)
    o_ref[...] = ((acc + bias_ref[...]) * jnp.float32(scale)).astype(o_ref.dtype)


def _matmul_bias_residual_kernel(a_ref, b_ref, bias_ref, r_ref, o_ref, *, scale):
    acc = jnp.dot(a_ref[...].astype(jnp.float32), b_ref[...],
                  preferred_element_type=jnp.float32)
    acc = acc + bias_ref[...] + r_ref[...].astype(jnp.float32)
    o_ref[...] = (acc * jnp.float32(scale)).astype(o_ref.dtype)


def _pallas_matmul(a, b, bias, *, residual=None, scale=1.0, out_dtype=None,
                   row_tile=256):
    """out = (a @ b + bias [+ residual]) * scale, tiled over rows of `a`."""
    M, K = a.shape
    Kb, Nc = b.shape
    assert K == Kb
    out_dtype = out_dtype or a.dtype

    # Zero-pad the contraction dim to a lane-aligned width so the MXU never
    # sees uninitialized padding lanes.
    Kp = _round_up(max(K, 128), 128)
    if Kp != K:
        a = jnp.pad(a, ((0, 0), (0, Kp - K)))
        b = jnp.pad(b, ((0, Kp - K), (0, 0)))
    b = b.astype(jnp.float32)
    bias2 = bias.reshape(1, Nc).astype(jnp.float32)

    tm = min(row_tile, _round_up(M, 8))
    grid = _cdiv(M, tm)

    in_specs = [
        pl.BlockSpec((tm, Kp), lambda i: (i, 0)),
        pl.BlockSpec((Kp, Nc), lambda i: (0, 0)),   # weights resident in VMEM
        pl.BlockSpec((1, Nc), lambda i: (0, 0)),    # bias resident in VMEM
    ]
    args = [a, b, bias2]
    if residual is None:
        kernel = functools.partial(_matmul_bias_kernel, scale=scale)
    else:
        kernel = functools.partial(_matmul_bias_residual_kernel, scale=scale)
        in_specs.append(pl.BlockSpec((tm, Nc), lambda i: (i, 0)))
        args.append(residual)

    return pl.pallas_call(
        kernel,
        out_shape=jax.ShapeDtypeStruct((M, Nc), out_dtype),
        grid=(grid,),
        in_specs=in_specs,
        out_specs=pl.BlockSpec((tm, Nc), lambda i: (i, 0)),
        compiler_params=pltpu.CompilerParams(
            dimension_semantics=("parallel",),
            vmem_limit_bytes=_VMEM_LIMIT,
        ),
    )(*args)


def _im2col_3x3(x):
    """(N, C, H, W) -> (N*H*W, C*9) patches; K ordered (c, dy, dx) to match
    torch Conv2d weight.reshape(out, C*9)."""
    # TODO(synk): patch extraction and the NCHW<->NHWC shuffles are plain XLA
    # reshape/pad/transpose ops; a fully fused Pallas conv would stream the 3x3
    # patches from HBM inside the kernel instead.
    N, C, H, W = x.shape
    xp = jnp.pad(x, ((0, 0), (0, 0), (1, 1), (1, 1)))
    slabs = [xp[:, :, dy:dy + H, dx:dx + W] for dy in range(3) for dx in range(3)]
    p = jnp.stack(slabs, axis=2)              # (N, C, 9, H, W)
    p = p.transpose(0, 3, 4, 1, 2)            # (N, H, W, C, 9)
    return p.reshape(N * H * W, C * 9)


# ---------------------------------------------------------------------------
# MiddleBlock forward
# ---------------------------------------------------------------------------

def middle_block_forward(x, params, *, eps=1e-5, slope=0.2):
    """params: conv1_w (Co,C,3,3), conv1_b (Co,), conv2_w (Co,Co,3,3), conv2_b
    (Co,), sc_w (Co,C,1,1), adain{1,2}_w / adain{1,2}_b ((N,C) / (N,Co)).
    AdaIN affine params are assigned externally in the original model."""
    N, C, H, W = x.shape
    Co = params["conv1_w"].shape[0]
    inv_sqrt2 = 1.0 / math.sqrt(2.0)

    # residual = sc(x): 1x1 conv without bias == matmul over channels.
    x_rows = x.transpose(0, 2, 3, 1).reshape(N * H * W, C)          # NHWC rows
    residual = _pallas_matmul(x_rows, params["sc_w"].reshape(Co, C).T,
                              jnp.zeros((Co,), jnp.float32))

    # h = conv1(leaky_relu(adain1(x)))     (LeakyReLU fused into the AdaIN kernel)
    h = adaptive_instance_norm_2d(x, params["adain1_w"], params["adain1_b"],
                                  eps=eps, negative_slope=slope)
    h = _pallas_matmul(_im2col_3x3(h), params["conv1_w"].reshape(Co, C * 9).T,
                       params["conv1_b"])
    h = h.reshape(N, H, W, Co).transpose(0, 3, 1, 2)                # back to NCHW

    # out = (residual + conv2(leaky_relu(adain2(h)))) / sqrt(2)
    # residual add and the 1/sqrt(2) scale are fused into the conv2 epilogue.
    h = adaptive_instance_norm_2d(h, params["adain2_w"], params["adain2_b"],
                                  eps=eps, negative_slope=slope)
    out = _pallas_matmul(_im2col_3x3(h), params["conv2_w"].reshape(Co, Co * 9).T,
                         params["conv2_b"], residual=residual, scale=inv_sqrt2)
    return out.reshape(N, H, W, Co).transpose(0, 3, 1, 2)


# ---------------------------------------------------------------------------
# Pure-JAX references
# ---------------------------------------------------------------------------

def _adain_reference(x, weight, bias, eps=1e-5):
    N, C, H, W = x.shape
    xf = x.reshape(N, C, -1).astype(jnp.float32)
    mean = xf.mean(-1, keepdims=True)
    std = jnp.sqrt(((xf - mean) ** 2).sum(-1, keepdims=True) / (H * W - 1))
    out = (xf - mean) / (std + eps) * weight.reshape(N, C, 1) + bias.reshape(N, C, 1)
    return out.reshape(N, C, H, W).astype(x.dtype)


def _middle_block_reference(x, params, eps=1e-5, slope=0.2):
    def conv(h, w, b, pad):
        y = jax.lax.conv_general_dilated(
            h.astype(jnp.float32), w.astype(jnp.float32), (1, 1),
            [(pad, pad), (pad, pad)],
            dimension_numbers=("NCHW", "OIHW", "NCHW"),
            precision=jax.lax.Precision.HIGHEST)
        if b is not None:
            y = y + b.reshape(1, -1, 1, 1)
        return y

    def act(h):
        return jnp.where(h >= 0, h, slope * h)

    residual = conv(x, params["sc_w"], None, 0)
    h = conv(act(_adain_reference(x, params["adain1_w"], params["adain1_b"], eps)),
             params["conv1_w"], params["conv1_b"], 1)
    h = conv(act(_adain_reference(h, params["adain2_w"], params["adain2_b"], eps)),
             params["conv2_w"], params["conv2_b"], 1)
    return (residual + h) / math.sqrt(2.0)


if __name__ == "__main__":
    N, in_dim, out_dim, H, W = 2, 4, 8, 16, 16
    key = jax.random.PRNGKey(0)
    ks = jax.random.split(key, 10)

    x = jax.random.normal(ks[0], (N, in_dim, H, W), dtype=jnp.float32)

    def _uinit(k, shape, fan_in):
        bound = 1.0 / math.sqrt(fan_in)
        return jax.random.uniform(k, shape, jnp.float32, -bound, bound)

    params = {
        "conv1_w": _uinit(ks[1], (out_dim, in_dim, 3, 3), in_dim * 9),
        "conv1_b": _uinit(ks[2], (out_dim,), in_dim * 9),
        "conv2_w": _uinit(ks[3], (out_dim, out_dim, 3, 3), out_dim * 9),
        "conv2_b": _uinit(ks[4], (out_dim,), out_dim * 9),
        "sc_w": _uinit(ks[5], (out_dim, in_dim, 1, 1), in_dim),
        # AdaIN params are normally assigned externally (e.g. by a style MLP);
        # synthesize deterministic ones here.
        "adain1_w": 1.0 + 0.1 * jax.random.normal(ks[6], (N, in_dim), jnp.float32),
        "adain1_b": 0.1 * jax.random.normal(ks[7], (N, in_dim), jnp.float32),
        "adain2_w": 1.0 + 0.1 * jax.random.normal(ks[8], (N, out_dim), jnp.float32),
        "adain2_b": 0.1 * jax.random.normal(ks[9], (N, out_dim), jnp.float32),
    }

    # (1) Standalone AdaIN kernel: tight elementwise check.
    a_out = jax.block_until_ready(
        adaptive_instance_norm_2d(x, params["adain1_w"], params["adain1_b"]))
    a_ref = _adain_reference(x, params["adain1_w"], params["adain1_b"])
    assert a_out.shape == x.shape
    assert jnp.allclose(a_out, a_ref, atol=1e-5, rtol=1e-5), \
        float(jnp.max(jnp.abs(a_out - a_ref)))

    # (2) Full MiddleBlock forward. The MXU may run f32 contractions as bf16
    # passes, so the end-to-end tolerance is correspondingly looser (genuine
    # layout/semantic bugs show up as O(1) errors).
    out = jax.block_until_ready(middle_block_forward(x, params))
    ref = _middle_block_reference(x, params)
    assert out.shape == (N, out_dim, H, W)
    err = float(jnp.max(jnp.abs(out - ref)))
    assert err < 3e-2, err

    print("KERNEL_OK")
</pallas_src>

<mosaic_0001>
module attributes {stable_mosaic.version = 11 : i64} {
  func.func @_adain_kernel(%arg0: i32, %arg1: memref<8x256xf32, #tpu.memory_space<vmem>>, %arg2: memref<8x1xf32, #tpu.memory_space<vmem>>, %arg3: memref<8x1xf32, #tpu.memory_space<vmem>>, %arg4: memref<8x256xf32, #tpu.memory_space<vmem>>) attributes {dimension_semantics = [#tpu.dimension_semantics<parallel>], iteration_bounds = array<i64: 1>, scalar_prefetch = 0 : i64, scratch_operands = 0 : i64, tpu.core_type = #tpu.core_type<tc>, window_params = [{transform_indices = @transform_0, window_bounds = array<i64: 8, 256>}, {pipeline_mode = #tpu.pipeline_mode<synchronous>, transform_indices = @transform_1, window_bounds = array<i64: 8, 1>}, {pipeline_mode = #tpu.pipeline_mode<synchronous>, transform_indices = @transform_2, window_bounds = array<i64: 8, 1>}, {transform_indices = @transform_3, window_bounds = array<i64: 8, 256>}]} {
    %c8_i32 = arith.constant 8 : i32
    %0 = arith.muli %arg0, %c8_i32 : i32
    %1 = tpu.assume_multiple %0, 8 : i32
    %c0 = arith.constant 0 : index
    %c0_0 = arith.constant 0 : index
    %2 = vector.load %arg1[%c0, %c0_0] : memref<8x256xf32, #tpu.memory_space<vmem>>, vector<8x256xf32>
    %cst = arith.constant dense<0.000000e+00> : vector<8xf32>
    %3 = vector.multi_reduction <add>, %2, %cst [1] : vector<8x256xf32> to vector<8xf32>
    %4 = vector.shape_cast %3 : vector<8xf32> to vector<8x1xf32>
    %cst_1 = arith.constant 2.560000e+02 : f32
    %5 = vector.broadcast %cst_1 : f32 to vector<8x1xf32>
    %6 = arith.divf %4, %5 : vector<8x1xf32>
    %7 = vector.broadcast %6 : vector<8x1xf32> to vector<8x256xf32>
    %8 = arith.subf %2, %7 : vector<8x256xf32>
    %9 = arith.mulf %8, %8 : vector<8x256xf32>
    %cst_2 = arith.constant dense<0.000000e+00> : vector<8xf32>
    %10 = vector.multi_reduction <add>, %9, %cst_2 [1] : vector<8x256xf32> to vector<8xf32>
    %11 = vector.shape_cast %10 : vector<8xf32> to vector<8x1xf32>
    %cst_3 = arith.constant 0.00392156886 : f32
    %12 = vector.broadcast %cst_3 : f32 to vector<8x1xf32>
    %13 = arith.mulf %11, %12 : vector<8x1xf32>
    %14 = math.sqrt %13 : vector<8x1xf32>
    %15 = arith.index_cast %1 : i32 to index
    %c0_4 = arith.constant 0 : index
    %16 = vector.load %arg2[%15, %c0_4] : memref<8x1xf32, #tpu.memory_space<vmem>>, vector<8x1xf32>
    %17 = arith.index_cast %1 : i32 to index
    %c0_5 = arith.constant 0 : index
    %18 = vector.load %arg3[%17, %c0_5] : memref<8x1xf32, #tpu.memory_space<vmem>>, vector<8x1xf32>
    %cst_6 = arith.constant 9.99999974E-6 : f32
    %19 = vector.broadcast %cst_6 : f32 to vector<8x1xf32>
    %20 = arith.addf %14, %19 : vector<8x1xf32>
    %21 = tpu.reciprocal %20 : vector<8x1xf32> -> vector<8x1xf32>
    %22 = arith.mulf %16, %21 : vector<8x1xf32>
    %23 = arith.mulf %6, %22 : vector<8x1xf32>
    %24 = arith.subf %18, %23 : vector<8x1xf32>
    %25 = vector.broadcast %22 : vector<8x1xf32> to vector<8x256xf32>
    %26 = arith.mulf %2, %25 : vector<8x256xf32>
    %27 = vector.broadcast %24 : vector<8x1xf32> to vector<8x256xf32>
    %28 = arith.addf %26, %27 : vector<8x256xf32>
    %c0_7 = arith.constant 0 : index
    %c0_8 = arith.constant 0 : index
    %29 = vector.load %arg4[%c0_7, %c0_8] : memref<8x256xf32, #tpu.memory_space<vmem>>, vector<8x256xf32>
    tpu.vector_store %arg4[%c0_7, %c0_8], %28 {strides = array<i32>} : memref<8x256xf32, #tpu.memory_space<vmem>>, vector<8x256xf32>,
    return
  }
  func.func @transform_0(%arg0: i32) -> (i32, i32) {
    %c0_i32 = arith.constant 0 : i32
    %c0_i32_0 = arith.constant 0 : i32
    return %arg0, %c0_i32 : i32, i32
  }
  func.func @transform_1(%arg0: i32) -> (i32, i32) {
    %c0_i32 = arith.constant 0 : i32
    %c0_i32_0 = arith.constant 0 : i32
    %c0_i32_1 = arith.constant 0 : i32
    return %c0_i32, %c0_i32_0 : i32, i32
  }
  func.func @transform_2(%arg0: i32) -> (i32, i32) {
    %c0_i32 = arith.constant 0 : i32
    %c0_i32_0 = arith.constant 0 : i32
    %c0_i32_1 = arith.constant 0 : i32
    return %c0_i32, %c0_i32_0 : i32, i32
  }
  func.func @transform_3(%arg0: i32) -> (i32, i32) {
    %c0_i32 = arith.constant 0 : i32
    %c0_i32_0 = arith.constant 0 : i32
    return %arg0, %c0_i32 : i32, i32
  }
}

</mosaic_0001>

<llo_original>
// kernel: tpu_custom_call.1
$region0: #{tpu_custom_call.1}
  #allocation0 [shape = 'u32[]', space=smem, size = 0x4, offset = 0x4, fixed_abs, tag = 'smem constant byte address 0x4 - core index']
  #allocation1 [shape = 'u32[72,128]{1,0:T(1,128)}', space=vmem, size = 0x9000, scoped, tag = 'internal scratch']
  %s0 = inlined_call_operand.vmem [shape: f32[8,256], index: 0, kind: input, shape index: {}]
  %s1 = inlined_call_operand.vmem [shape: f32[8,1], index: 1, kind: input, shape index: {}]
  %s2 = inlined_call_operand.vmem [shape: f32[8,1], index: 2, kind: input, shape index: {}]
  %s3 = inlined_call_operand.hbm [shape: f32[8,256], index: 3, kind: output, shape index: {}]
  %s4 = sld [smem:[#allocation0]]
  $region22: #{tpu_custom_call.1} parent=0
    _
  %s6 = ssub.s32 1, %s4
  %s7 = scalar_select 0, %s6, %s4
  $region1: #{tpu_custom_call.1} parent=0
    #allocation2 [shape = 'u8[8192]{0}', space=vmem, size = 0x2000, scoped, tag = 'output window, operand 0, single buffered']
    #allocation3 [shape = 's32[1]{0}', space=sflag, size = 0x4, scoped, tag = 'scoped memory for tpu_custom_call.1']
    %8 = vsyncpa [#allocation3], 0
    // Predicated region
    $region2: #{tpu_custom_call.1} parent=1 // pred_check
      _
    $region3: #{tpu_custom_call.1} parent=1 // pred_check_branch
      %10 = sbr.rel (0) target = $region5
    $region4: #{tpu_custom_call.1} parent=1 // pred_region
      _
    $region5: #{tpu_custom_call.1} parent=1 // pred_fallthru
      _
    // Predicated region
    $region6: #{tpu_custom_call.1} parent=1 // pred_check
      _
    $region7: #{tpu_custom_call.1} parent=1 // pred_check_branch
      %12 = sbr.rel (0) target = $region9
    $region8: #{tpu_custom_call.1} parent=1 // pred_region
      _
    $region9: #{tpu_custom_call.1} parent=1 // pred_fallthru
      _
    // Predicated region
    $region10: #{tpu_custom_call.1} parent=1 // pred_check
      _
    $region11: #{tpu_custom_call.1} parent=1 // pred_check_branch
      %14 = sbr.rel (0) target = $region13
    $region12: #{tpu_custom_call.1} parent=1 // pred_region
      _
    $region13: #{tpu_custom_call.1} parent=1 // pred_fallthru
      _
    %s15 = smul.u32 0, 8
    %v16 = vld [vmem:[%s0] sm:$0xff]
    %v17 = vld [vmem:[%s0 + $0x8] sm:$0xff]
    %v18 = vadd.f32 %v16, %v17
    %19 = vadd.xlane.f32.xlu0 %v18
    %v20 = vpop.xlane.xlu0 %19
    %v21 = vrcp.pop 256.0
    %v22 = vmul.f32 256.0, %v21
    %v23 = vsub.f32 1.0, %v22
    %v24 = vmul.f32 %v21, %v23
    %v25 = vadd.f32 %v21, %v24
    %vm26 = vweird.f32 %v21
    %v27 = vsel %vm26, %v21, %v25
    %v28 = vmul.f32 %v20, %v27
    %v29 = vsub.f32 %v16, %v28
    %v30 = vsub.f32 %v17, %v28
    %v31 = vmul.f32 %v29, %v29
    %v32 = vmul.f32 %v30, %v30
    %v33 = vadd.f32 %v31, %v32
    %34 = vadd.xlane.f32.xlu0 %v33
    %v35 = vpop.xlane.xlu0 %34
    %v36 = vmul.f32 %v35, 0.003921569
    %v37 = vrsqrt.pop %v36
    %v38 = vmul.f32 %v37, %v36
    %v39 = vmul.f32 %v38, %v37
    %v40 = vmul.f32 0.5, %v39
    %v41 = vsub.f32 1.5, %v40
    %v42 = vmul.f32 %v37, %v41
    %v43 = vmul.f32 %v36, %v42
    %vm44 = vcmp.eq.f32.partialorder %v36, inf
    %v45 = vsel %vm44, %v36, %v43
    %vm46 = vcmp.eq.f32.partialorder %v36, 0.0
    %v47 = vand.u32 %v36, 2147483648
    %v48 = vsel %vm46, %v47, %v45
    %s49 = scalar_lea.vmem %s1, %s15
    %v50 = vld [vmem:[%s49] sm:$0xff]
    %s51 = scalar_lea.vmem %s2, %s15
    %v52 = vld [vmem:[%s51] sm:$0xff]
    %v53 = vadd.f32 %v48, 1e-05
    %v54 = vrcp.pop %v53
    %v55 = vmul.f32 %v53, %v54
    %v56 = vsub.f32 1.0, %v55
    %v57 = vmul.f32 %v54, %v56
    %v58 = vadd.f32 %v54, %v57
    %vm59 = vweird.f32 %v53
    %vm60 = vweird.f32 %v54
    %vm61 = vmor %vm59, %vm60
    %v62 = vsel %vm61, %v54, %v58
    %v63 = vand.u32 2147483647, %v53
    %vm64 = vcmp.eq.f32.partialorder %v63, 8.507059e+37
    %v65 = vand.u32 %v53, 2147483648
    %v66 = vor.u32 1.1754944e-38, %v65
    %v67 = vsel %vm64, %v66, %v62
    %v68 = vmul.f32 %v50, %v67
    %v69 = vmul.f32 %v28, %v68
    %v70 = vsub.f32 %v52, %v69
    %72 = vset.pattern.permute.xlu0 0
    %73 = vperm.xlu0 %72, %v68
    %v74 = vpop.permute.xlu0 %73
    %v76 = vmul.f32 %v16, %v74
    %v77 = vmul.f32 %v17, %v74
    %79 = vset.pattern.permute.xlu0 0
    %80 = vperm.xlu0 %79, %v70
    %v81 = vpop.permute.xlu0 %80
    %v83 = vadd.f32 %v76, %v81
    %v84 = vadd.f32 %v77, %v81
    %85 = vst [vmem:[#allocation2] sm:$0xff] %v83
    %86 = vst [vmem:[#allocation2 + $0x8] sm:$0xff] %v84
    // Predicated region
    $region14: #{tpu_custom_call.1} parent=1 // pred_check
      _
    $region15: #{tpu_custom_call.1} parent=1 // pred_check_branch
      %88 = sbr.rel (0) target = $region17
    $region16: #{tpu_custom_call.1} parent=1 // pred_region
      %90 = vsyncadd [#allocation3], 0
      %s92 = sshll.u32 [#allocation2], 4
      %s93 = int_to_ptr.vmem [resolvable:$true] %s92
      %s94 = sshll.u32 %s3, 4
      %s95 = int_to_ptr.hbm [resolvable:$true] %s94
      %97 = dma.vmem_to_hbm [thread:$0]  %s93, 256, %s95, [#allocation3]
    $region17: #{tpu_custom_call.1} parent=1 // pred_fallthru
      _
    // Predicated region
    $region18: #{tpu_custom_call.1} parent=1 // pred_check
      _
    $region19: #{tpu_custom_call.1} parent=1 // pred_check_branch
      %99 = sbr.rel (0) target = $region21
    $region20: #{tpu_custom_call.1} parent=1 // pred_region
      %101 = dma.done [#allocation3], 256
    $region21: #{tpu_custom_call.1} parent=1 // pred_fallthru
      _
    %102 = vsyncpa [#allocation3], 1

</llo_original>
